<compile_context>
chip_gen: v7x
topology: tpu7x:2x2x1
jax: 0.10.0
libtpu: 0.0.40
codegen_flags: <defaults>
</compile_context>

<pallas_src>
import functools

import jax
import jax.numpy as jnp
from jax.experimental import pallas as pl
from jax.experimental.pallas import tpu as pltpu

LANE = 128   # lane width (last dim of a vreg)
SUB = 8      # sublane alignment for row tiles


def _round_up(x, m):
    return (x + m - 1) // m * m


# ----------------------------------------------------------------------------
# Kernel body: all num_layers Linear(+ReLU) stages fused; params VMEM-resident.
# ----------------------------------------------------------------------------
def _fused_mlp_kernel(x_ref, *refs, num_layers):
    o_ref = refs[-1]
    wb = refs[:-1]                       # w0, b0, w1, b1, ..., w_{L-1}, b_{L-1}
    h = x_ref[...]                       # (tm, in_dim), caller dtype (f32)
    for i in range(num_layers):
        w = wb[2 * i][...]               # resident: bf16 (intermediate) / f32 (last)
        b = wb[2 * i + 1][...]           # resident: f32 (1, N)
        # Cast the activation to the weight dtype right at the MXU input:
        # bf16 x bf16 for hidden layers, full f32 x f32 for the final layer.
        y = jnp.dot(h.astype(w.dtype), w, preferred_element_type=jnp.float32) + b
        if i < num_layers - 1:
            h = jnp.maximum(y, 0.0)      # ReLU in f32; padded lanes stay exactly 0
        else:
            o_ref[...] = y.astype(o_ref.dtype)


# ----------------------------------------------------------------------------
# One-time parameter packing (do this at init, NOT per forward call).
# ----------------------------------------------------------------------------
def prepare_mlp_params(params):
    """Pad + cast nn.Linear params once into kernel-ready form.

    params: list of (W, b) with W of shape (in, out)  (i.e. torch weight.T).
    Layout produced:
      * layer 0 input width  = true in_dim      (x is not feature-padded)
      * hidden widths        = round_up(hidden, 128), zero-padded rows/cols/bias
      * last layer out width = true out_dim     (narrow masked output store)
      * hidden weights bf16, last weight f32, all biases f32.
    Padded lanes are exactly 0 through every layer, so nothing leaks.
    """
    L = len(params)
    packed = []
    for i, (w, b) in enumerate(params):
        k_true, n_true = w.shape
        kp = k_true if i == 0 else _round_up(k_true, LANE)
        np_ = n_true if i == L - 1 else _round_up(n_true, LANE)
        w_dt = jnp.float32 if i == L - 1 else jnp.bfloat16
        wp = jnp.zeros((kp, np_), w_dt).at[:k_true, :n_true].set(w.astype(w_dt))
        bp = jnp.zeros((1, np_), jnp.float32).at[0, :n_true].set(
            b.astype(jnp.float32))
        packed.append((wp, bp))
    return packed


# ----------------------------------------------------------------------------
# Forward wrapper.
# ----------------------------------------------------------------------------
def mlp_forward(x, packed_params, *, tm_max=512, target_row_tiles=4):
    """Equivalent of MLP.forward; packed_params from prepare_mlp_params."""
    num_layers = len(packed_params)
    lead_shape = x.shape[:-1]
    in_dim = x.shape[-1]
    out_dim = packed_params[-1][0].shape[1]
    assert packed_params[0][0].shape[0] == in_dim

    x2d = x.reshape(-1, in_dim)          # no-copy reshape of leading dims
    M = x2d.shape[0]
    out_dtype = x.dtype

    # Row tile: sublane-aligned, sized so the grid has >= target_row_tiles
    # blocks when M allows (keeps both v7x TensorCores fed via "parallel").
    tm = min(tm_max, max(SUB, _round_up(-(-M // target_row_tiles), SUB)))
    grid_m = pl.cdiv(M, tm)              # ragged last block is masked by Pallas

    # --- specs -----------------------------------------------------------------
    args = [x2d]
    in_specs = [pl.BlockSpec((tm, in_dim), lambda i: (i, 0))]   # double-buffered
    for wp, bp in packed_params:
        args += [wp, bp]
        # Constant index_map => parameters are VMEM-resident; Buffered(1) avoids
        # pointless double buffering and halves their VMEM footprint.
        in_specs += [
            pl.BlockSpec(wp.shape, lambda i: (0, 0), pipeline_mode=pl.Buffered(1)),
            pl.BlockSpec(bp.shape, lambda i: (0, 0), pipeline_mode=pl.Buffered(1)),
        ]
    out_spec = pl.BlockSpec((tm, out_dim), lambda i: (i, 0))

    # --- scheduling hints --------------------------------------------------------
    flops = sum(2 * grid_m * tm * wp.shape[0] * wp.shape[1]
                for wp, _ in packed_params)
    bytes_accessed = (
        x2d.size * x2d.dtype.itemsize
        + M * out_dim * jnp.dtype(out_dtype).itemsize
        + sum(a.size * a.dtype.itemsize for a in args[1:])
    )
    cost = pl.CostEstimate(flops=flops, transcendentals=0,
                           bytes_accessed=bytes_accessed)

    # VMEM footprint: resident params (1 buffer each) + double-buffered x/out
    # tiles + f32 activation headroom.
    max_width = max([in_dim, out_dim]
                    + [wp.shape[1] for wp, _ in packed_params])
    vmem_needed = (
        sum(a.size * a.dtype.itemsize for a in args[1:])
        + 2 * tm * in_dim * x2d.dtype.itemsize
        + 2 * tm * out_dim * jnp.dtype(out_dtype).itemsize
        + 4 * tm * max_width * 4
    )
    # Generation-aware limit: leave Mosaic ~16 MiB of internal headroom and
    # never ask above ~100 MiB even on 128 MiB parts (v5e/v6e). On v7x
    # (64 MiB/TC) this resolves to ~48 MiB.
    try:
        cap = pltpu.get_tpu_info().vmem_capacity_bytes
    except Exception:
        cap = 64 << 20                   # conservative (v7x per-TC) fallback
    vmem_limit = int(min(max(2 * vmem_needed, 32 << 20),
                         cap - (16 << 20), 100 << 20))
    if vmem_needed > vmem_limit:
        # TODO(synk): fall back to a per-layer / K-tiled pipeline
        # (pltpu.emit_pipeline inside the body) when the padded parameter set
        # no longer fits VMEM-resident (first breaks on v7x as hidden grows).
        raise ValueError(
            f"MLP params + tiles ({vmem_needed} B) exceed VMEM budget "
            f"({vmem_limit} B); reduce tm or tile the layers.")

    kernel = functools.partial(_fused_mlp_kernel, num_layers=num_layers)
    out = pl.pallas_call(
        kernel,
        out_shape=jax.ShapeDtypeStruct((M, out_dim), out_dtype),
        grid_spec=pl.GridSpec(grid=(grid_m,), in_specs=in_specs,
                              out_specs=out_spec),
        compiler_params=pltpu.CompilerParams(
            dimension_semantics=("parallel",),
            vmem_limit_bytes=vmem_limit,
        ),
        cost_estimate=cost,
    )(*args)

    return out.reshape(*lead_shape, out_dim)


# ----------------------------------------------------------------------------
# Deterministic synthetic params + pure-JAX reference.
# ----------------------------------------------------------------------------
def init_mlp_params(key, input_dim, hidden_dim, output_dim, num_layers):
    """Synthetic params matching nn.Linear init; W stored as (in, out)."""
    h = [hidden_dim] * (num_layers - 1)
    dims = list(zip([input_dim] + h, h + [output_dim]))
    params = []
    for (n_in, n_out) in dims:
        key, kw, kb = jax.random.split(key, 3)
        scale = 1.0 / jnp.sqrt(jnp.float32(n_in))
        w = jax.random.uniform(kw, (n_in, n_out), jnp.float32, -scale, scale)
        b = jax.random.uniform(kb, (n_out,), jnp.float32, -scale, scale)
        params.append((w, b))
    return params


def mlp_reference(x, params):
    """Pure-JAX f32 reference matching the PyTorch module."""
    num_layers = len(params)
    y = x
    for i, (w, b) in enumerate(params):
        y = jnp.dot(y, w) + b
        if i < num_layers - 1:
            y = jnp.maximum(y, 0.0)
    return y


if __name__ == "__main__":
    key = jax.random.PRNGKey(0)
    k_x, k_p = jax.random.split(key)

    # Small shapes consistent with the module's usage (e.g. query embeddings).
    batch, seq = 2, 8
    input_dim, hidden_dim, output_dim, num_layers = 32, 32, 16, 3

    x = jax.random.normal(k_x, (batch, seq, input_dim), jnp.float32)
    params = init_mlp_params(k_p, input_dim, hidden_dim, output_dim, num_layers)

    packed = prepare_mlp_params(params)       # one-time pad/cast, reused per call
    out = mlp_forward(x, packed)
    out = jax.block_until_ready(out)

    ref = mlp_reference(x, params)
    assert out.shape == (batch, seq, output_dim), out.shape
    # Hidden layers use bf16 MXU inputs (f32 accumulation); final layer is f32.
    assert jnp.allclose(out, ref, atol=3e-2, rtol=3e-2), "mismatch vs reference"

    print("KERNEL_OK")
</pallas_src>

<mosaic_0001>
module attributes {stable_mosaic.version = 11 : i64} {
  func.func @_fused_mlp_kernel(%arg0: i32, %arg1: memref<8x32xf32, #tpu.memory_space<vmem>>, %arg2: memref<32x128xbf16, #tpu.memory_space<vmem>>, %arg3: memref<1x128xf32, #tpu.memory_space<vmem>>, %arg4: memref<128x128xbf16, #tpu.memory_space<vmem>>, %arg5: memref<1x128xf32, #tpu.memory_space<vmem>>, %arg6: memref<128x16xf32, #tpu.memory_space<vmem>>, %arg7: memref<1x16xf32, #tpu.memory_space<vmem>>, %arg8: memref<8x16xf32, #tpu.memory_space<vmem>>) attributes {dimension_semantics = [#tpu.dimension_semantics<parallel>], iteration_bounds = array<i64: 2>, scalar_prefetch = 0 : i64, scratch_operands = 0 : i64, tpu.core_type = #tpu.core_type<tc>, window_params = [{transform_indices = @transform_0, window_bounds = array<i64: 8, 32>}, {pipeline_mode = #tpu.pipeline_mode<synchronous>, transform_indices = @transform_1, window_bounds = array<i64: 32, 128>}, {pipeline_mode = #tpu.pipeline_mode<synchronous>, transform_indices = @transform_2, window_bounds = array<i64: 1, 128>}, {pipeline_mode = #tpu.pipeline_mode<synchronous>, transform_indices = @transform_3, window_bounds = array<i64: 128, 128>}, {pipeline_mode = #tpu.pipeline_mode<synchronous>, transform_indices = @transform_4, window_bounds = array<i64: 1, 128>}, {pipeline_mode = #tpu.pipeline_mode<synchronous>, transform_indices = @transform_5, window_bounds = array<i64: 128, 16>}, {pipeline_mode = #tpu.pipeline_mode<synchronous>, transform_indices = @transform_6, window_bounds = array<i64: 1, 16>}, {transform_indices = @transform_7, window_bounds = array<i64: 8, 16>}]} {
    %c0 = arith.constant 0 : index
    %c0_0 = arith.constant 0 : index
    %0 = vector.load %arg1[%c0, %c0_0] : memref<8x32xf32, #tpu.memory_space<vmem>>, vector<8x32xf32>
    %c0_1 = arith.constant 0 : index
    %c0_2 = arith.constant 0 : index
    %1 = vector.load %arg2[%c0_1, %c0_2] : memref<32x128xbf16, #tpu.memory_space<vmem>>, vector<32x128xbf16>
    %c0_3 = arith.constant 0 : index
    %c0_4 = arith.constant 0 : index
    %2 = vector.load %arg3[%c0_3, %c0_4] : memref<1x128xf32, #tpu.memory_space<vmem>>, vector<1x128xf32>
    %3 = arith.truncf %0 : vector<8x32xf32> to vector<8x32xbf16>
    %cst = arith.constant dense<0.000000e+00> : vector<8x128xf32>
    %4 = tpu.matmul %3, %1, %cst {dimension_numbers = #tpu.dot_dimension_numbers<[1], [0], [0], [1], [0, 0, 1, 1], [], []>} : vector<8x32xbf16>, vector<32x128xbf16>, vector<8x128xf32> -> vector<8x128xf32>
    %5 = vector.broadcast %2 : vector<1x128xf32> to vector<8x128xf32>
    %6 = arith.addf %4, %5 : vector<8x128xf32>
    %cst_5 = arith.constant 0.000000e+00 : f32
    %7 = vector.broadcast %cst_5 : f32 to vector<8x128xf32>
    %8 = arith.maximumf %6, %7 : vector<8x128xf32>
    %c0_6 = arith.constant 0 : index
    %c0_7 = arith.constant 0 : index
    %9 = vector.load %arg4[%c0_6, %c0_7] : memref<128x128xbf16, #tpu.memory_space<vmem>>, vector<128x128xbf16>
    %c0_8 = arith.constant 0 : index
    %c0_9 = arith.constant 0 : index
    %10 = vector.load %arg5[%c0_8, %c0_9] : memref<1x128xf32, #tpu.memory_space<vmem>>, vector<1x128xf32>
    %11 = arith.truncf %8 : vector<8x128xf32> to vector<8x128xbf16>
    %cst_10 = arith.constant dense<0.000000e+00> : vector<8x128xf32>
    %12 = tpu.matmul %11, %9, %cst_10 {dimension_numbers = #tpu.dot_dimension_numbers<[1], [0], [0], [1], [0, 0, 1, 1], [], []>} : vector<8x128xbf16>, vector<128x128xbf16>, vector<8x128xf32> -> vector<8x128xf32>
    %13 = vector.broadcast %10 : vector<1x128xf32> to vector<8x128xf32>
    %14 = arith.addf %12, %13 : vector<8x128xf32>
    %cst_11 = arith.constant 0.000000e+00 : f32
    %15 = vector.broadcast %cst_11 : f32 to vector<8x128xf32>
    %16 = arith.maximumf %14, %15 : vector<8x128xf32>
    %c0_12 = arith.constant 0 : index
    %c0_13 = arith.constant 0 : index
    %17 = vector.load %arg6[%c0_12, %c0_13] : memref<128x16xf32, #tpu.memory_space<vmem>>, vector<128x16xf32>
    %c0_14 = arith.constant 0 : index
    %c0_15 = arith.constant 0 : index
    %18 = vector.load %arg7[%c0_14, %c0_15] : memref<1x16xf32, #tpu.memory_space<vmem>>, vector<1x16xf32>
    %cst_16 = arith.constant dense<0.000000e+00> : vector<8x16xf32>
    %19 = tpu.matmul %16, %17, %cst_16 {dimension_numbers = #tpu.dot_dimension_numbers<[1], [0], [0], [1], [0, 0, 1, 1], [], []>} : vector<8x128xf32>, vector<128x16xf32>, vector<8x16xf32> -> vector<8x16xf32>
    %20 = vector.broadcast %18 : vector<1x16xf32> to vector<8x16xf32>
    %21 = arith.addf %19, %20 : vector<8x16xf32>
    %c0_17 = arith.constant 0 : index
    %c0_18 = arith.constant 0 : index
    %22 = vector.load %arg8[%c0_17, %c0_18] : memref<8x16xf32, #tpu.memory_space<vmem>>, vector<8x16xf32>
    tpu.vector_store %arg8[%c0_17, %c0_18], %21 {strides = array<i32>} : memref<8x16xf32, #tpu.memory_space<vmem>>, vector<8x16xf32>,
    return
  }
  func.func @transform_0(%arg0: i32) -> (i32, i32) {
    %c0_i32 = arith.constant 0 : i32
    %c0_i32_0 = arith.constant 0 : i32
    return %arg0, %c0_i32 : i32, i32
  }
  func.func @transform_1(%arg0: i32) -> (i32, i32) {
    %c0_i32 = arith.constant 0 : i32
    %c0_i32_0 = arith.constant 0 : i32
    %c0_i32_1 = arith.constant 0 : i32
    return %c0_i32, %c0_i32_0 : i32, i32
  }
  func.func @transform_2(%arg0: i32) -> (i32, i32) {
    %c0_i32 = arith.constant 0 : i32
    %c0_i32_0 = arith.constant 0 : i32
    %c0_i32_1 = arith.constant 0 : i32
    return %c0_i32, %c0_i32_0 : i32, i32
  }
  func.func @transform_3(%arg0: i32) -> (i32, i32) {
    %c0_i32 = arith.constant 0 : i32
    %c0_i32_0 = arith.constant 0 : i32
    %c0_i32_1 = arith.constant 0 : i32
    return %c0_i32, %c0_i32_0 : i32, i32
  }
  func.func @transform_4(%arg0: i32) -> (i32, i32) {
    %c0_i32 = arith.constant 0 : i32
    %c0_i32_0 = arith.constant 0 : i32
    %c0_i32_1 = arith.constant 0 : i32
    return %c0_i32, %c0_i32_0 : i32, i32
  }
  func.func @transform_5(%arg0: i32) -> (i32, i32) {
    %c0_i32 = arith.constant 0 : i32
    %c0_i32_0 = arith.constant 0 : i32
    %c0_i32_1 = arith.constant 0 : i32
    return %c0_i32, %c0_i32_0 : i32, i32
  }
  func.func @transform_6(%arg0: i32) -> (i32, i32) {
    %c0_i32 = arith.constant 0 : i32
    %c0_i32_0 = arith.constant 0 : i32
    %c0_i32_1 = arith.constant 0 : i32
    return %c0_i32, %c0_i32_0 : i32, i32
  }
  func.func @transform_7(%arg0: i32) -> (i32, i32) {
    %c0_i32 = arith.constant 0 : i32
    %c0_i32_0 = arith.constant 0 : i32
    return %arg0, %c0_i32 : i32, i32
  }
}

</mosaic_0001>

<llo_original>
// kernel: tpu_custom_call.1
$region0: #{tpu_custom_call.1}
  #allocation0 [shape = 'u32[]', space=smem, size = 0x4, offset = 0x4, fixed_abs, tag = 'smem constant byte address 0x4 - core index']
  #allocation1 [shape = 'u32[144,128]{1,0:T(1,128)}', space=vmem, size = 0x12000, scoped, tag = 'internal scratch']
  %s0 = inlined_call_operand.vmem [shape: f32[16,32], index: 0, kind: input, shape index: {}]
  %s1 = inlined_call_operand.vmem [shape: bf16[32,128], index: 1, kind: input, shape index: {}]
  %s2 = inlined_call_operand.vmem [shape: f32[1,128], index: 2, kind: input, shape index: {}]
  %s3 = inlined_call_operand.vmem [shape: bf16[128,128], index: 3, kind: input, shape index: {}]
  %s4 = inlined_call_operand.vmem [shape: f32[1,128], index: 4, kind: input, shape index: {}]
  %s5 = inlined_call_operand.vmem [shape: f32[128,16], index: 5, kind: input, shape index: {}]
  %s6 = inlined_call_operand.vmem [shape: f32[1,16], index: 6, kind: input, shape index: {}]
  %s7 = inlined_call_operand.hbm [shape: f32[16,16], index: 7, kind: output, shape index: {}]
  %s8 = sld [smem:[#allocation0]]
  $region61: #{tpu_custom_call.1} parent=0
    _
  %s10 = ssub.s32 1, %s8
  %s11 = scalar_select 0, %s10, %s8
  $region1: #{tpu_custom_call.1} parent=0
    #allocation2 [shape = 'u8[8192]{0}', space=vmem, size = 0x2000, scoped, tag = 'output window, operand 0']
    #allocation3 [shape = 's32[2]{0}', space=sflag, size = 0x8, scoped, tag = 'scoped memory for tpu_custom_call.1']
    %12 = vsyncpa [#allocation3], 0
    %s13 = scalar_lea.sflag [#allocation3], 1
    %14 = vsyncpa %s13, 0
    loop: start=0, step=1, limit=4
    $region2: #{tpu_custom_call.1} parent=1 // loop_pre_header
      _
    $region3: #{tpu_custom_call.1} parent=1 // loop_header
      %s16 = sphi 0, %s20
      %p17 = scmp.ge.s32.totalorder %s16, 4
      %s26 = sphi 0, %s28
      %s29 = sphi 0, %s26
      %s30 = sphi 0, %s29
      %s46 = sphi 0, %s30
      %s50 = sphi 0, %s50
      %s52 = sphi 0, %s50
      %s53 = sphi 0, %s52
      %s67 = sphi 0, %s53
      %s71 = sphi 0, %s71
      %s73 = sphi 0, %s71
      %s74 = sphi 0, %s73
      %s88 = sphi 0, %s74
      %s92 = sphi 0, %s92
      %s94 = sphi 0, %s92
      %s95 = sphi 0, %s94
      %s109 = sphi 0, %s95
      %s113 = sphi 0, %s113
      %s115 = sphi 0, %s113
      %s116 = sphi 0, %s115
      %s130 = sphi 0, %s116
      %s134 = sphi 0, %s134
      %s136 = sphi 0, %s134
      %s137 = sphi 0, %s136
      %s151 = sphi 0, %s137
      %s155 = sphi 0, %s155
      %s157 = sphi 0, %s155
      %s158 = sphi 0, %s157
      %s172 = sphi 0, %s158
      %s178 = sphi 0, %s180
      %s181 = sphi 0, %s178
      %s182 = sphi 0, %s181
      %s198 = sphi 0, %s182
    $region4: #{tpu_custom_call.1} parent=1 // loop_header_branch
      %19 = sbr.rel (%p17) target = $region8
    $region5: #{tpu_custom_call.1} parent=1 // loop_body
      %s21 = ssub.s32 %s16, 1
      %s22 = ssub.s32 %s16, 2
      %s23 = sadd.s32 %s16, 1
      %s24 = ssub.s32 %s16, %s23
      %p25 = scmp.eq.s32.totalorder %s24, 0
      %s27 = sadd.s32 %s26, 1
      %s28 = scalar_select %p25, %s26, %s27
      %p31 = pneg %p25
      %p32 = scmp.eq.s32.totalorder %s16, 1
      %p33 = por %p31, %p32
      %p34 = scmp.ne.s32.totalorder %s26, %s29
      %p35 = scmp.eq.s32.totalorder %s16, 0
      %p36 = por %p34, %p35
      %p37 = scmp.ne.s32.totalorder %s26, %s29
      %p38 = scmp.eq.s32.totalorder %s21, 1
      %p39 = por %p37, %p38
      %p40 = scmp.ne.s32.totalorder %s29, %s30
      %p41 = scmp.eq.s32.totalorder %s21, 0
      %p42 = por %p40, %p41
      %p43 = scmp.ne.s32.totalorder %s29, %s30
      %p44 = scmp.eq.s32.totalorder %s22, 1
      %p45 = por %p43, %p44
      %p47 = scmp.ne.s32.totalorder %s30, %s46
      %p48 = scmp.eq.s32.totalorder %s22, 0
      %p49 = por %p47, %p48
      %s51 = sadd.s32 %s50, 1
      %p54 = scmp.eq.s32.totalorder %s16, 1
      %p55 = scmp.ne.s32.totalorder %s50, %s52
      %p56 = scmp.eq.s32.totalorder %s16, 0
      %p57 = por %p55, %p56
      %p58 = scmp.ne.s32.totalorder %s50, %s52
      %p59 = scmp.eq.s32.totalorder %s21, 1
      %p60 = por %p58, %p59
      %p61 = scmp.ne.s32.totalorder %s52, %s53
      %p62 = scmp.eq.s32.totalorder %s21, 0
      %p63 = por %p61, %p62
      %p64 = scmp.ne.s32.totalorder %s52, %s53
      %p65 = scmp.eq.s32.totalorder %s22, 1
      %p66 = por %p64, %p65
      %p68 = scmp.ne.s32.totalorder %s53, %s67
      %p69 = scmp.eq.s32.totalorder %s22, 0
      %p70 = por %p68, %p69
      %s72 = sadd.s32 %s71, 1
      %p75 = scmp.eq.s32.totalorder %s16, 1
      %p76 = scmp.ne.s32.totalorder %s71, %s73
      %p77 = scmp.eq.s32.totalorder %s16, 0
      %p78 = por %p76, %p77
      %p79 = scmp.ne.s32.totalorder %s71, %s73
      %p80 = scmp.eq.s32.totalorder %s21, 1
      %p81 = por %p79, %p80
      %p82 = scmp.ne.s32.totalorder %s73, %s74
      %p83 = scmp.eq.s32.totalorder %s21, 0
      %p84 = por %p82, %p83
      %p85 = scmp.ne.s32.totalorder %s73, %s74
      %p86 = scmp.eq.s32.totalorder %s22, 1
      %p87 = por %p85, %p86
      %p89 = scmp.ne.s32.totalorder %s74, %s88
      %p90 = scmp.eq.s32.totalorder %s22, 0
      %p91 = por %p89, %p90
      %s93 = sadd.s32 %s92, 1
      %p96 = scmp.eq.s32.totalorder %s16, 1
      %p97 = scmp.ne.s32.totalorder %s92, %s94
      %p98 = scmp.eq.s32.totalorder %s16, 0
      %p99 = por %p97, %p98
      %p100 = scmp.ne.s32.totalorder %s92, %s94
      %p101 = scmp.eq.s32.totalorder %s21, 1
      %p102 = por %p100, %p101
      %p103 = scmp.ne.s32.totalorder %s94, %s95
      %p104 = scmp.eq.s32.totalorder %s21, 0
      %p105 = por %p103, %p104
      %p106 = scmp.ne.s32.totalorder %s94, %s95
      %p107 = scmp.eq.s32.totalorder %s22, 1
      %p108 = por %p106, %p107
      %p110 = scmp.ne.s32.totalorder %s95, %s109
      %p111 = scmp.eq.s32.totalorder %s22, 0
      %p112 = por %p110, %p111
      %s114 = sadd.s32 %s113, 1
      %p117 = scmp.eq.s32.totalorder %s16, 1
      %p118 = scmp.ne.s32.totalorder %s113, %s115
      %p119 = scmp.eq.s32.totalorder %s16, 0
      %p120 = por %p118, %p119
      %p121 = scmp.ne.s32.totalorder %s113, %s115
      %p122 = scmp.eq.s32.totalorder %s21, 1
      %p123 = por %p121, %p122
      %p124 = scmp.ne.s32.totalorder %s115, %s116
      %p125 = scmp.eq.s32.totalorder %s21, 0
      %p126 = por %p124, %p125
      %p127 = scmp.ne.s32.totalorder %s115, %s116
      %p128 = scmp.eq.s32.totalorder %s22, 1
      %p129 = por %p127, %p128
      %p131 = scmp.ne.s32.totalorder %s116, %s130
      %p132 = scmp.eq.s32.totalorder %s22, 0
      %p133 = por %p131, %p132
      %s135 = sadd.s32 %s134, 1
      %p138 = scmp.eq.s32.totalorder %s16, 1
      %p139 = scmp.ne.s32.totalorder %s134, %s136
      %p140 = scmp.eq.s32.totalorder %s16, 0
      %p141 = por %p139, %p140
      %p142 = scmp.ne.s32.totalorder %s134, %s136
      %p143 = scmp.eq.s32.totalorder %s21, 1
      %p144 = por %p142, %p143
      %p145 = scmp.ne.s32.totalorder %s136, %s137
      %p146 = scmp.eq.s32.totalorder %s21, 0
      %p147 = por %p145, %p146
      %p148 = scmp.ne.s32.totalorder %s136, %s137
      %p149 = scmp.eq.s32.totalorder %s22, 1
      %p150 = por %p148, %p149
      %p152 = scmp.ne.s32.totalorder %s137, %s151
      %p153 = scmp.eq.s32.totalorder %s22, 0
      %p154 = por %p152, %p153
      %s156 = sadd.s32 %s155, 1
      %p159 = scmp.eq.s32.totalorder %s16, 1
      %p160 = scmp.ne.s32.totalorder %s155, %s157
      %p161 = scmp.eq.s32.totalorder %s16, 0
      %p162 = por %p160, %p161
      %p163 = scmp.ne.s32.totalorder %s155, %s157
      %p164 = scmp.eq.s32.totalorder %s21, 1
      %p165 = por %p163, %p164
      %p166 = scmp.ne.s32.totalorder %s157, %s158
      %p167 = scmp.eq.s32.totalorder %s21, 0
      %p168 = por %p166, %p167
      %p169 = scmp.ne.s32.totalorder %s157, %s158
      %p170 = scmp.eq.s32.totalorder %s22, 1
      %p171 = por %p169, %p170
      %p173 = scmp.ne.s32.totalorder %s158, %s172
      %p174 = scmp.eq.s32.totalorder %s22, 0
      %p175 = por %p173, %p174
      %s176 = ssub.s32 %s16, %s23
      %p177 = scmp.eq.s32.totalorder %s176, 0
      %s179 = sadd.s32 %s178, 1
      %s180 = scalar_select %p177, %s178, %s179
      %p183 = pneg %p177
      %p184 = scmp.eq.s32.totalorder %s16, 1
      %p185 = por %p183, %p184
      %p186 = scmp.ne.s32.totalorder %s178, %s181
      %p187 = scmp.eq.s32.totalorder %s16, 0
      %p188 = por %p186, %p187
      %p189 = scmp.ne.s32.totalorder %s178, %s181
      %p190 = scmp.eq.s32.totalorder %s21, 1
      %p191 = por %p189, %p190
      %p192 = scmp.ne.s32.totalorder %s181, %s182
      %p193 = scmp.eq.s32.totalorder %s21, 0
      %p194 = por %p192, %p193
      %p195 = scmp.ne.s32.totalorder %s181, %s182
      %p196 = scmp.eq.s32.totalorder %s22, 1
      %p197 = por %p195, %p196
      %p199 = scmp.ne.s32.totalorder %s182, %s198
      %p200 = scmp.eq.s32.totalorder %s22, 0
      %p201 = por %p199, %p200
      %p202 = scmp.le.s32.totalorder 1, %s16
      %p203 = scmp.lt.s32.totalorder %s16, 3
      %p204 = pnand %p202, %p203
      %p205 = pneg %p204
      // Predicated region
      $region9: #{tpu_custom_call.1} parent=5 // pred_check
        _
      $region10: #{tpu_custom_call.1} parent=5 // pred_check_branch
        %207 = sbr.rel (%p204) target = $region12
      $region11: #{tpu_custom_call.1} parent=5 // pred_region
        %s208 = ssub.s32 %s16, 1
        // Predicated region
        $region13: #{tpu_custom_call.1} parent=11 // pred_check
          %p209 = pneg %p63
        $region14: #{tpu_custom_call.1} parent=11 // pred_check_branch
          %211 = sbr.rel (%p209) target = $region16
        $region15: #{tpu_custom_call.1} parent=11 // pred_region
          _
        $region16: #{tpu_custom_call.1} parent=11 // pred_fallthru
          _
        // Predicated region
        $region17: #{tpu_custom_call.1} parent=11 // pred_check
          %p212 = pneg %p84
        $region18: #{tpu_custom_call.1} parent=11 // pred_check_branch
          %214 = sbr.rel (%p212) target = $region20
        $region19: #{tpu_custom_call.1} parent=11 // pred_region
          _
        $region20: #{tpu_custom_call.1} parent=11 // pred_fallthru
          _
        // Predicated region
        $region21: #{tpu_custom_call.1} parent=11 // pred_check
          %p215 = pneg %p105
        $region22: #{tpu_custom_call.1} parent=11 // pred_check_branch
          %217 = sbr.rel (%p215) target = $region24
        $region23: #{tpu_custom_call.1} parent=11 // pred_region
          _
        $region24: #{tpu_custom_call.1} parent=11 // pred_fallthru
          _
        // Predicated region
        $region25: #{tpu_custom_call.1} parent=11 // pred_check
          %p218 = pneg %p126
        $region26: #{tpu_custom_call.1} parent=11 // pred_check_branch
          %220 = sbr.rel (%p218) target = $region28
        $region27: #{tpu_custom_call.1} parent=11 // pred_region
          _
        $region28: #{tpu_custom_call.1} parent=11 // pred_fallthru
          _
        // Predicated region
        $region29: #{tpu_custom_call.1} parent=11 // pred_check
          %p221 = pneg %p147
        $region30: #{tpu_custom_call.1} parent=11 // pred_check_branch
          %223 = sbr.rel (%p221) target = $region32
        $region31: #{tpu_custom_call.1} parent=11 // pred_region
          _
        $region32: #{tpu_custom_call.1} parent=11 // pred_fallthru
          _
        // Predicated region
        $region33: #{tpu_custom_call.1} parent=11 // pred_check
          %p224 = pneg %p168
        $region34: #{tpu_custom_call.1} parent=11 // pred_check_branch
          %226 = sbr.rel (%p224) target = $region36
        $region35: #{tpu_custom_call.1} parent=11 // pred_region
          _
        $region36: #{tpu_custom_call.1} parent=11 // pred_fallthru
          _
      $region12: #{tpu_custom_call.1} parent=5 // pred_fallthru
        _
      %p227 = scmp.lt.s32.totalorder %s16, 2
      // Predicated region
      $region37: #{tpu_custom_call.1} parent=5 // pred_check
        %p228 = pneg %p227
      $region38: #{tpu_custom_call.1} parent=5 // pred_check_branch
        %230 = sbr.rel (%p228) target = $region40
      $region39: #{tpu_custom_call.1} parent=5 // pred_region
        // Predicated region
        $region41: #{tpu_custom_call.1} parent=39 // pred_check
          %p231 = pneg %p36
        $region42: #{tpu_custom_call.1} parent=39 // pred_check_branch
          %233 = sbr.rel (%p231) target = $region44
        $region43: #{tpu_custom_call.1} parent=39 // pred_region
          %p234 = scmp.lt.s32.totalorder %s16, 1
          %s235 = scalar_select %p234, %s16, 1
          %s236 = smul.addr %s235, 8
          %s237 = scalar_lea.vmem %s0, %s236
        $region44: #{tpu_custom_call.1} parent=39 // pred_fallthru
          _
      $region40: #{tpu_custom_call.1} parent=5 // pred_fallthru
        _
      %p238 = scmp.le.s32.totalorder 1, %s16
      %p239 = scmp.lt.s32.totalorder %s16, 3
      %p240 = pnand %p238, %p239
      %p241 = pneg %p240
      // Predicated region
      $region45: #{tpu_custom_call.1} parent=5 // pred_check
        _
      $region46: #{tpu_custom_call.1} parent=5 // pred_check_branch
        %243 = sbr.rel (%p240) target = $region48
      $region47: #{tpu_custom_call.1} parent=5 // pred_region
        %s244 = ssub.s32 %s16, 1
        %p245 = scmp.lt.s32.totalorder %s21, 1
        %s246 = scalar_select %p245, %s21, 1
        %s247 = smul.addr %s246, 8
        %s248 = scalar_lea.vmem %s0, %s247
        %p249 = pneg %p42
        %p250 = pneg %p39
        %p251 = pneg %p63
        %p252 = pneg %p60
        %p253 = pneg %p84
        %p254 = pneg %p81
        %p255 = pneg %p105
        %p256 = pneg %p102
        %p257 = pneg %p126
        %p258 = pneg %p123
        %p259 = pneg %p147
        %p260 = pneg %p144
        %p261 = pneg %p168
        %p262 = pneg %p165
        %p263 = pneg %p194
        %p264 = pneg %p191
        %s265 = sand.u32 %s181, 1
        %s266 = scalar_lea.sflag [#allocation3], %s265
        %s267 = sand.u32 %s181, 1
        %s268 = smul.addr %s267, 8
        %s269 = scalar_lea.vmem [#allocation2], %s268
        %p270 = scmp.lt.s32.totalorder %s21, 1
        %s271 = scalar_select %p270, %s21, 1
        %s272 = smul.addr %s271, 8
        %s273 = scalar_lea.vmem %s0, %s272
        %v275 = vld [vmem:[%s273] sm:$0xff]
        %v276 = vld [vmem:[%s1] sm:$0xf]
        %v277 = vld [vmem:[%s1 + $0x4] sm:$0xf]
        %v278 = vld [vmem:[%s1 + $0x8] sm:$0xf]
        %v279 = vld [vmem:[%s1 + $0xc] sm:$0xf]
        %v280 = vld [vmem:[%s2] sm:$0x1]
        %v281 = vpack.c.bf16 %v275, %v275
        %v283 = vlaneseq
        %v284 = vshrl.u32 %v283, 7
        %v285 = vsub.s32 0, %v284
        %v286 = vrot.slane %v280, %v285
        %v292 = vunpack.c.l.b16 %v276
        %v293 = vunpack.c.l.b16 %v277
        %v294 = vunpack.c.l.b16 %v278
        %v295 = vunpack.c.l.b16 %v279
        %v296 = vpack.c.b16 %v293, %v292
        %v297 = vpack.c.b16 %v295, %v294
        %vm300 = vcmask 261120
        %v302 = vsel %vm300, %v281, 0
        %304 = vmatprep.subr.bf16.mxu0 0
        %305 = vmatpush1.bf16.msra.mxu0 %v296
        %306 = vmatprep.subr.bf16.mxu0 0
        %307 = vmatpush1.bf16.msra.mxu0 %v297
        %308 = vmatprep.subr.bf16.mxu0 0
        %309 = vmatpush1.bf16.msra.mxu0 0
        %310 = vmatprep.subr.bf16.mxu0 0
        %311 = vmatpush1.bf16.msra.mxu0 0
        %312 = vmatprep.subr.bf16.mxu0 0
        %313 = vmatpush1.bf16.msra.mxu0 0
        %314 = vmatprep.subr.bf16.mxu0 0
        %315 = vmatpush1.bf16.msra.mxu0 0
        %316 = vmatprep.subr.bf16.mxu0 0
        %317 = vmatpush1.bf16.msra.mxu0 0
        %318 = vmatprep.subr.bf16.mxu0 0
        %319 = vmatpush1.bf16.msra.mxu0 0
        %320 = vmatprep.subr.bf16.mxu0 0
        %321 = vmatpush1.bf16.msra.mxu0 0
        %322 = vmatprep.subr.bf16.mxu0 0
        %323 = vmatpush1.bf16.msra.mxu0 0
        %324 = vmatprep.subr.bf16.mxu0 0
        %325 = vmatpush1.bf16.msra.mxu0 0
        %326 = vmatprep.subr.bf16.mxu0 0
        %327 = vmatpush1.bf16.msra.mxu0 0
        %328 = vmatprep.subr.bf16.mxu0 0
        %329 = vmatpush1.bf16.msra.mxu0 0
        %330 = vmatprep.subr.bf16.mxu0 0
        %331 = vmatpush1.bf16.msra.mxu0 0
        %332 = vmatprep.subr.bf16.mxu0 0
        %333 = vmatpush1.bf16.msra.mxu0 0
        %334 = vmatprep.subr.bf16.mxu0 0
        %335 = vmatpush1.bf16.msra.mxu0 0
        %336 = vmatprep.mubr.bf16.mxu0 0
        %337 = vmatmul.mubr.bf16.gmra.mrb[0].mxu0 %v302
        %v338 = vpop.f32.mrb[0].mxu0
        %v339 = vadd.f32 %v286, %v338
        %v340 = vpop.f32.mrb[0].mxu0
        %v341 = vpop.f32.mrb[0].mxu0
        %v342 = vpop.f32.mrb[0].mxu0
        %343 = vdwg.mxu0
        %v344 = vmax.f32 %v339, 0.0
        %v345 = vld [vmem:[%s3] sm:$0xf]
        %v346 = vld [vmem:[%s3 + $0x4] sm:$0xf]
        %v347 = vld [vmem:[%s3 + $0x8] sm:$0xf]
        %v348 = vld [vmem:[%s3 + $0xc] sm:$0xf]
        %v349 = vld [vmem:[%s3 + $0x10] sm:$0xf]
        %v350 = vld [vmem:[%s3 + $0x14] sm:$0xf]
        %v351 = vld [vmem:[%s3 + $0x18] sm:$0xf]
        %v352 = vld [vmem:[%s3 + $0x1c] sm:$0xf]
        %v353 = vld [vmem:[%s3 + $0x20] sm:$0xf]
        %v354 = vld [vmem:[%s3 + $0x24] sm:$0xf]
        %v355 = vld [vmem:[%s3 + $0x28] sm:$0xf]
        %v356 = vld [vmem:[%s3 + $0x2c] sm:$0xf]
        %v357 = vld [vmem:[%s3 + $0x30] sm:$0xf]
        %v358 = vld [vmem:[%s3 + $0x34] sm:$0xf]
        %v359 = vld [vmem:[%s3 + $0x38] sm:$0xf]
        %v360 = vld [vmem:[%s3 + $0x3c] sm:$0xf]
        %v361 = vld [vmem:[%s4] sm:$0x1]
        %v362 = vpack.c.bf16 %v344, %v344
        %v364 = vlaneseq
        %v365 = vshrl.u32 %v364, 7
        %v366 = vsub.s32 0, %v365
        %v367 = vrot.slane %v361, %v366
        %v385 = vunpack.c.l.b16 %v345
        %v386 = vunpack.c.l.b16 %v346
        %v387 = vunpack.c.l.b16 %v347
        %v388 = vunpack.c.l.b16 %v348
        %v389 = vunpack.c.l.b16 %v349
        %v390 = vunpack.c.l.b16 %v350
        %v391 = vunpack.c.l.b16 %v351
        %v392 = vunpack.c.l.b16 %v352
        %v393 = vunpack.c.l.b16 %v353
        %v394 = vunpack.c.l.b16 %v354
        %v395 = vunpack.c.l.b16 %v355
        %v396 = vunpack.c.l.b16 %v356
        %v397 = vunpack.c.l.b16 %v357
        %v398 = vunpack.c.l.b16 %v358
        %v399 = vunpack.c.l.b16 %v359
        %v400 = vunpack.c.l.b16 %v360
        %v401 = vpack.c.b16 %v386, %v385
        %v402 = vpack.c.b16 %v388, %v387
        %v403 = vpack.c.b16 %v390, %v389
        %v404 = vpack.c.b16 %v392, %v391
        %v405 = vpack.c.b16 %v394, %v393
        %v406 = vpack.c.b16 %v396, %v395
        %v407 = vpack.c.b16 %v398, %v397
        %v408 = vpack.c.b16 %v400, %v399
        %417 = vmatprep.subr.bf16.mxu0 0
        %418 = vmatpush1.bf16.msra.mxu0 %v401
        %419 = vmatprep.subr.bf16.mxu0 0
        %420 = vmatpush1.bf16.msra.mxu0 %v402
        %421 = vmatprep.subr.bf16.mxu0 0
        %422 = vmatpush1.bf16.msra.mxu0 %v403
        %423 = vmatprep.subr.bf16.mxu0 0
        %424 = vmatpush1.bf16.msra.mxu0 %v404
        %425 = vmatprep.subr.bf16.mxu0 0
        %426 = vmatpush1.bf16.msra.mxu0 %v405
        %427 = vmatprep.subr.bf16.mxu0 0
        %428 = vmatpush1.bf16.msra.mxu0 %v406
        %429 = vmatprep.subr.bf16.mxu0 0
        %430 = vmatpush1.bf16.msra.mxu0 %v407
        %431 = vmatprep.subr.bf16.mxu0 0
        %432 = vmatpush1.bf16.msra.mxu0 %v408
        %433 = vmatprep.subr.bf16.mxu0 0
        %434 = vmatpush1.bf16.msra.mxu0 0
        %435 = vmatprep.subr.bf16.mxu0 0
        %436 = vmatpush1.bf16.msra.mxu0 0
        %437 = vmatprep.subr.bf16.mxu0 0
        %438 = vmatpush1.bf16.msra.mxu0 0
        %439 = vmatprep.subr.bf16.mxu0 0
        %440 = vmatpush1.bf16.msra.mxu0 0
        %441 = vmatprep.subr.bf16.mxu0 0
        %442 = vmatpush1.bf16.msra.mxu0 0
        %443 = vmatprep.subr.bf16.mxu0 0
        %444 = vmatpush1.bf16.msra.mxu0 0
        %445 = vmatprep.subr.bf16.mxu0 0
        %446 = vmatpush1.bf16.msra.mxu0 0
        %447 = vmatprep.subr.bf16.mxu0 0
        %448 = vmatpush1.bf16.msra.mxu0 0
        %449 = vmatprep.mubr.bf16.mxu0 0
        %450 = vmatmul.mubr.bf16.gmra.mrb[0].mxu0 %v362
        %v451 = vpop.f32.mrb[0].mxu0
        %v452 = vadd.f32 %v367, %v451
        %v453 = vpop.f32.mrb[0].mxu0
        %v454 = vpop.f32.mrb[0].mxu0
        %v455 = vpop.f32.mrb[0].mxu0
        %456 = vdwg.mxu0
        %v457 = vmax.f32 %v452, 0.0
        %v458 = vld [vmem:[%s5] sm:$0xff]
        %v459 = vld [vmem:[%s5 + $0x8] sm:$0xff]
        %v460 = vld [vmem:[%s5 + $0x10] sm:$0xff]
        %v461 = vld [vmem:[%s5 + $0x18] sm:$0xff]
        %v462 = vld [vmem:[%s5 + $0x20] sm:$0xff]
        %v463 = vld [vmem:[%s5 + $0x28] sm:$0xff]
        %v464 = vld [vmem:[%s5 + $0x30] sm:$0xff]
        %v465 = vld [vmem:[%s5 + $0x38] sm:$0xff]
        %v466 = vld [vmem:[%s5 + $0x40] sm:$0xff]
        %v467 = vld [vmem:[%s5 + $0x48] sm:$0xff]
        %v468 = vld [vmem:[%s5 + $0x50] sm:$0xff]
        %v469 = vld [vmem:[%s5 + $0x58] sm:$0xff]
        %v470 = vld [vmem:[%s5 + $0x60] sm:$0xff]
        %v471 = vld [vmem:[%s5 + $0x68] sm:$0xff]
        %v472 = vld [vmem:[%s5 + $0x70] sm:$0xff]
        %v473 = vld [vmem:[%s5 + $0x78] sm:$0xff]
        %v474 = vld [vmem:[%s6] sm:$0x1]
        %v476 = vlaneseq
        %v477 = vshrl.u32 %v476, 7
        %v478 = vsub.s32 0, %v477
        %v479 = vrot.slane %v474, %v478
        %481 = vmatprep.subr.mxu0 0.0
        %482 = vmatpush1.msra.mxu0 %v458
        %483 = vmatprep.subr.mxu0 0.0
        %484 = vmatpush1.msra.mxu0 %v459
        %485 = vmatprep.subr.mxu0 0.0
        %486 = vmatpush1.msra.mxu0 %v460
        %487 = vmatprep.subr.mxu0 0.0
        %488 = vmatpush1.msra.mxu0 %v461
        %489 = vmatprep.subr.mxu0 0.0
        %490 = vmatpush1.msra.mxu0 %v462
        %491 = vmatprep.subr.mxu0 0.0
        %492 = vmatpush1.msra.mxu0 %v463
        %493 = vmatprep.subr.mxu0 0.0
        %494 = vmatpush1.msra.mxu0 %v464
        %495 = vmatprep.subr.mxu0 0.0
        %496 = vmatpush1.msra.mxu0 %v465
        %497 = vmatprep.subr.mxu0 0.0
        %498 = vmatpush1.msra.mxu0 %v466
        %499 = vmatprep.subr.mxu0 0.0
        %500 = vmatpush1.msra.mxu0 %v467
        %501 = vmatprep.subr.mxu0 0.0
        %502 = vmatpush1.msra.mxu0 %v468
        %503 = vmatprep.subr.mxu0 0.0
        %504 = vmatpush1.msra.mxu0 %v469
        %505 = vmatprep.subr.mxu0 0.0
        %506 = vmatpush1.msra.mxu0 %v470
        %507 = vmatprep.subr.mxu0 0.0
        %508 = vmatpush1.msra.mxu0 %v471
        %509 = vmatprep.subr.mxu0 0.0
        %510 = vmatpush1.msra.mxu0 %v472
        %511 = vmatprep.subr.mxu0 0.0
        %512 = vmatpush1.msra.mxu0 %v473
        %513 = vmatprep.subr.mxu0 0.0
        %514 = vmatpush1.msra.mxu0 0.0
        %515 = vmatprep.subr.mxu0 0.0
        %516 = vmatpush1.msra.mxu0 0.0
        %517 = vmatprep.subr.mxu0 0.0
        %518 = vmatpush1.msra.mxu0 0.0
        %519 = vmatprep.subr.mxu0 0.0
        %520 = vmatpush1.msra.mxu0 0.0
        %521 = vmatprep.subr.mxu0 0.0
        %522 = vmatpush1.msra.mxu0 0.0
        %523 = vmatprep.subr.mxu0 0.0
        %524 = vmatpush1.msra.mxu0 0.0
        %525 = vmatprep.subr.mxu0 0.0
        %526 = vmatpush1.msra.mxu0 0.0
        %527 = vmatprep.subr.mxu0 0.0
        %528 = vmatpush1.msra.mxu0 0.0
        %529 = vmatprep.subr.mxu0 0.0
        %530 = vmatpush1.msra.mxu0 0.0
        %531 = vmatprep.subr.mxu0 0.0
        %532 = vmatpush1.msra.mxu0 0.0
        %533 = vmatprep.subr.mxu0 0.0
        %534 = vmatpush1.msra.mxu0 0.0
        %535 = vmatprep.subr.mxu0 0.0
        %536 = vmatpush1.msra.mxu0 0.0
        %537 = vmatprep.subr.mxu0 0.0
        %538 = vmatpush1.msra.mxu0 0.0
        %539 = vmatprep.subr.mxu0 0.0
        %540 = vmatpush1.msra.mxu0 0.0
        %541 = vmatprep.subr.mxu0 0.0
        %542 = vmatpush1.msra.mxu0 0.0
        %543 = vmatprep.subr.mxu0 0.0
        %544 = vmatpush1.msra.mxu0 0.0
        %545 = vmatprep.mubr.f32.mxu0 0.0
        %546 = vmatmul.mubr.f32.gmra.mrb[0].mxu0 %v457
        %v547 = vpop.f32.mrb[0].mxu0
        %v548 = vadd.f32 %v479, %v547
        %v549 = vpop.f32.mrb[0].mxu0
        %550 = vdwg.mxu0
        %vm551 = vcmask 130048
        %552 = vst.msk [vmem:[%s269] sm:$0xff] %vm551, %v548
        %s553 = sand.u32 %s181, 1
        %s554 = scalar_lea.sflag [#allocation3], %s553
        %s555 = sand.u32 %s181, 1
        %s556 = smul.addr %s555, 8
        %s557 = scalar_lea.vmem [#allocation2], %s556
        // Predicated region
        $region49: #{tpu_custom_call.1} parent=47 // pred_check
          %p558 = pneg %p191
        $region50: #{tpu_custom_call.1} parent=47 // pred_check_branch
          %560 = sbr.rel (%p558) target = $region52
        $region51: #{tpu_custom_call.1} parent=47 // pred_region
          %s562 = ssub.s32 128, 128
          %563 = vsyncadd %s554, %s562
          %s564 = smul.addr %s21, 128
          %s565 = scalar_lea.hbm %s7, %s564
          %s567 = sshll.u32 %s557, 4
          %s568 = int_to_ptr.vmem [resolvable:$true] %s567
          %570 = dma.vmem_to_hbm [thread:$0]  %s568, 128, %s565, %s554
        $region52: #{tpu_custom_call.1} parent=47 // pred_fallthru
          _
      $region48: #{tpu_custom_call.1} parent=5 // pred_fallthru
        _
      %p571 = scmp.le.s32.totalorder 2, %s16
      // Predicated region
      $region53: #{tpu_custom_call.1} parent=5 // pred_check
        %p572 = pneg %p571
      $region54: #{tpu_custom_call.1} parent=5 // pred_check_branch
        %574 = sbr.rel (%p572) target = $region56
      $region55: #{tpu_custom_call.1} parent=5 // pred_region
        %s575 = ssub.s32 %s16, 2
        // Predicated region
        $region57: #{tpu_custom_call.1} parent=55 // pred_check
          %p576 = pneg %p197
        $region58: #{tpu_custom_call.1} parent=55 // pred_check_branch
          %578 = sbr.rel (%p576) target = $region60
        $region59: #{tpu_custom_call.1} parent=55 // pred_region
          %s579 = sand.u32 %s182, 1
          %s580 = scalar_lea.sflag [#allocation3], %s579
          %s581 = sand.u32 %s182, 1
          %s582 = smul.addr %s581, 8
          %s583 = scalar_lea.vmem [#allocation2], %s582
          %584 = dma.done %s580, 128
        $region60: #{tpu_custom_call.1} parent=55 // pred_fallthru
          _
      $region56: #{tpu_custom_call.1} parent=5 // pred_fallthru
        _
    $region6: #{tpu_custom_call.1} parent=1 // loop_footer
      %s20 = sadd.s32 1, %s16
    $region7: #{tpu_custom_call.1} parent=1 // loop_footer_branch
      %15 = sbr.rel target = $region3
    $region8: #{tpu_custom_call.1} parent=1 // loop_exit
      _
    %585 = vsyncpa [#allocation3], 1
    %s586 = scalar_lea.sflag [#allocation3], 1
    %587 = vsyncpa %s586, 1

</llo_original>
